<compile_context>
chip_gen: v7x
topology: tpu7x:2x2x1
jax: 0.10.0
libtpu: 0.0.40
codegen_flags: <defaults>
</compile_context>

<pallas_src>
import functools

import jax
import jax.numpy as jnp
from jax.experimental import pallas as pl
from jax.experimental.pallas import tpu as pltpu

EPS = 1e-6
LANE = 128
SUBLANE = 8
# 4096 rows x 128 lanes x 4B = 2 MiB per f32 input block; 2 inputs x 2
# pipeline buffers = 8 MiB pipeline VMEM -> safe at default scoped VMEM on
# v5e (16 MiB), v6e (32 MiB) and v7x (32 MiB).
MAX_BLOCK_ROWS = 4096


def _adv_loss_kernel(real_ref, fake_ref, out_ref, *, valid_rows, block_rows):
    i = pl.program_id(0)
    last = pl.num_programs(0) - 1

    r = real_ref[...].astype(jnp.float32)
    f = fake_ref[...].astype(jnp.float32)
    r = jnp.clip(r, EPS, 1.0 - EPS)
    f = jnp.clip(f, EPS, 1.0 - EPS)
    # One EUP log per element instead of two.
    contrib = jnp.log(r * (1.0 - f))

    def partial_sum(x):
        # vreg-wide partial reduction: (block_rows, 128) -> (8, 128) via pure
        # VPU adds; the final cross-lane/sublane reduce happens once, outside.
        return x.reshape(block_rows // SUBLANE, SUBLANE, LANE).sum(axis=0)

    # Fast path: every non-final block is fully valid -> no mask work at all.
    @pl.when(i < last)
    def _():
        out_ref[...] = partial_sum(contrib)

    # Last block may extend past the valid rows (Pallas leaves stale data in
    # the OOB region).  Row-only int32 compare: one iota, no multiply, and the
    # select discards any NaN/garbage from clip/log of the stale region.
    @pl.when(i == last)
    def _():
        row_ids = jax.lax.broadcasted_iota(jnp.int32, (block_rows, LANE), 0)
        valid = (i * block_rows + row_ids) < valid_rows
        out_ref[...] = partial_sum(jnp.where(valid, contrib, 0.0))


def adversarial_loss(d_out_real, d_out_fake):
    """Pallas TPU version of AdversarialLoss.forward. Returns a float32 scalar."""
    assert d_out_real.shape == d_out_fake.shape
    total = int(d_out_real.size)

    # Keep native dtype through the wrapper (bf16 inputs -> half the HBM read
    # traffic); cast to f32 inside the kernel.
    flat_r = d_out_real.reshape(-1)
    flat_f = d_out_fake.reshape(-1)

    tile = SUBLANE * LANE
    aligned = (total // tile) * tile  # kernel handles the tile-aligned prefix

    total_sum = jnp.float32(0.0)

    if aligned > 0:
        rows = aligned // LANE  # multiple of 8 by construction
        r2d = flat_r[:aligned].reshape(rows, LANE)
        f2d = flat_f[:aligned].reshape(rows, LANE)

        # Large lane-dense tiles, but aim for >= 2 grid steps so v7x's two
        # TensorCores can both be used on the "parallel" axis.
        block_rows = min(rows, MAX_BLOCK_ROWS)
        if rows > SUBLANE:
            half = -(-rows // 2)                       # cdiv(rows, 2)
            half = -(-half // SUBLANE) * SUBLANE       # round up to sublane
            block_rows = min(block_rows, half)
        num_blocks = -(-rows // block_rows)

        kernel = functools.partial(
            _adv_loss_kernel, valid_rows=rows, block_rows=block_rows
        )

        partials = pl.pallas_call(
            kernel,
            out_shape=jax.ShapeDtypeStruct(
                (num_blocks * SUBLANE, LANE), jnp.float32
            ),
            grid_spec=pltpu.PrefetchScalarGridSpec(
                num_scalar_prefetch=0,
                grid=(num_blocks,),
                in_specs=[
                    pl.BlockSpec((block_rows, LANE), lambda i: (i, 0)),
                    pl.BlockSpec((block_rows, LANE), lambda i: (i, 0)),
                ],
                out_specs=pl.BlockSpec((SUBLANE, LANE), lambda i: (i, 0)),
            ),
            compiler_params=pltpu.CompilerParams(
                # Per-block partials -> no loop-carried accumulator -> grid
                # axis shards across TensorCores (benefits v7x; harmless
                # elsewhere).
                dimension_semantics=("parallel",),
            ),
        )(r2d, f2d)

        total_sum = total_sum + jnp.sum(partials)

    if aligned < total:
        # Ragged tail (< 1024 elements) in plain jnp -- avoids the full-array
        # pad/copy that cannot fuse into the pallas custom call.
        tr = jnp.clip(flat_r[aligned:].astype(jnp.float32), EPS, 1.0 - EPS)
        tf = jnp.clip(flat_f[aligned:].astype(jnp.float32), EPS, 1.0 - EPS)
        total_sum = total_sum + jnp.sum(jnp.log(tr) + jnp.log(1.0 - tf))

    return total_sum / jnp.float32(total)


def adversarial_loss_ref(d_out_real, d_out_fake):
    r = jnp.clip(d_out_real.astype(jnp.float32), EPS, 1.0 - EPS)
    f = jnp.clip(d_out_fake.astype(jnp.float32), EPS, 1.0 - EPS)
    return jnp.mean(jnp.log(r) + jnp.log(1.0 - f))


if __name__ == "__main__":
    key = jax.random.PRNGKey(0)
    k1, k2, k3, k4 = jax.random.split(key, 4)

    # Discriminator outputs, NCHW, values in (0, 1) like sigmoid outputs.
    shape = (2, 4, 16, 16)  # 2048 elements -> fully tile-aligned path
    d_real = jax.nn.sigmoid(jax.random.normal(k1, shape, dtype=jnp.float32))
    d_fake = jax.nn.sigmoid(jax.random.normal(k2, shape, dtype=jnp.float32))

    loss = jax.block_until_ready(adversarial_loss(d_real, d_fake))
    ref = adversarial_loss_ref(d_real, d_fake)
    assert jnp.allclose(loss, ref, atol=1e-5, rtol=1e-5), (loss, ref)

    # Ragged shape -> exercises aligned-prefix kernel + jnp tail path.
    shape2 = (2, 3, 15, 17)  # 1530 elements
    d_real2 = jax.nn.sigmoid(jax.random.normal(k3, shape2, dtype=jnp.float32))
    d_fake2 = jax.nn.sigmoid(jax.random.normal(k4, shape2, dtype=jnp.float32))

    loss2 = jax.block_until_ready(adversarial_loss(d_real2, d_fake2))
    ref2 = adversarial_loss_ref(d_real2, d_fake2)
    assert jnp.allclose(loss2, ref2, atol=1e-5, rtol=1e-5), (loss2, ref2)

    print("KERNEL_OK")
</pallas_src>

<mosaic_0001>
module attributes {stable_mosaic.version = 11 : i64} {
  func.func @_adv_loss_kernel(%arg0: i32, %arg1: memref<8x128xf32, #tpu.memory_space<vmem>>, %arg2: memref<8x128xf32, #tpu.memory_space<vmem>>, %arg3: memref<8x128xf32, #tpu.memory_space<vmem>>) attributes {dimension_semantics = [#tpu.dimension_semantics<parallel>], iteration_bounds = array<i64: 2>, scalar_prefetch = 0 : i64, scratch_operands = 0 : i64, tpu.core_type = #tpu.core_type<tc>, window_params = [{transform_indices = @transform_0, window_bounds = array<i64: 8, 128>}, {transform_indices = @transform_1, window_bounds = array<i64: 8, 128>}, {transform_indices = @transform_2, window_bounds = array<i64: 8, 128>}]} {
    %c0 = arith.constant 0 : index
    %c0_0 = arith.constant 0 : index
    %0 = vector.load %arg1[%c0, %c0_0] : memref<8x128xf32, #tpu.memory_space<vmem>>, vector<8x128xf32>
    %c0_1 = arith.constant 0 : index
    %c0_2 = arith.constant 0 : index
    %1 = vector.load %arg2[%c0_1, %c0_2] : memref<8x128xf32, #tpu.memory_space<vmem>>, vector<8x128xf32>
    %cst = arith.constant 9.99999997E-7 : f32
    %cst_3 = arith.constant 0.999998986 : f32
    %2 = vector.broadcast %cst : f32 to vector<8x128xf32>
    %3 = arith.maximumf %2, %0 : vector<8x128xf32>
    %4 = vector.broadcast %cst_3 : f32 to vector<8x128xf32>
    %5 = arith.minimumf %4, %3 : vector<8x128xf32>
    %cst_4 = arith.constant 9.99999997E-7 : f32
    %cst_5 = arith.constant 0.999998986 : f32
    %6 = vector.broadcast %cst_4 : f32 to vector<8x128xf32>
    %7 = arith.maximumf %6, %1 : vector<8x128xf32>
    %8 = vector.broadcast %cst_5 : f32 to vector<8x128xf32>
    %9 = arith.minimumf %8, %7 : vector<8x128xf32>
    %cst_6 = arith.constant 1.000000e+00 : f32
    %10 = vector.broadcast %cst_6 : f32 to vector<8x128xf32>
    %11 = arith.subf %10, %9 : vector<8x128xf32>
    %12 = arith.mulf %5, %11 : vector<8x128xf32>
    %13 = math.log %12 : vector<8x128xf32>
    %c1_i32 = arith.constant 1 : i32
    %14 = arith.cmpi slt, %arg0, %c1_i32 : i32
    %15 = arith.extui %14 : i1 to i32
    %c0_i32 = arith.constant 0 : i32
    %16 = arith.cmpi ne, %15, %c0_i32 : i32
    scf.if %16 {
      %20 = vector.shape_cast %13 : vector<8x128xf32> to vector<1x8x128xf32>
      %cst_9 = arith.constant dense<0.000000e+00> : vector<8x128xf32>
      %21 = vector.multi_reduction <add>, %20, %cst_9 [0] : vector<1x8x128xf32> to vector<8x128xf32>
      %c0_10 = arith.constant 0 : index
      %c0_11 = arith.constant 0 : index
      %22 = vector.load %arg3[%c0_10, %c0_11] : memref<8x128xf32, #tpu.memory_space<vmem>>, vector<8x128xf32>
      tpu.vector_store %arg3[%c0_10, %c0_11], %21 {strides = array<i32>} : memref<8x128xf32, #tpu.memory_space<vmem>>, vector<8x128xf32>,
    } else {
    }
    %c1_i32_7 = arith.constant 1 : i32
    %17 = arith.cmpi eq, %arg0, %c1_i32_7 : i32
    %18 = arith.extui %17 : i1 to i32
    %c0_i32_8 = arith.constant 0 : i32
    %19 = arith.cmpi ne, %18, %c0_i32_8 : i32
    scf.if %19 {
      %20 = tpu.iota {dimensions = array<i32: 0>} : vector<8x128xi32>
      %c8_i32 = arith.constant 8 : i32
      %21 = arith.muli %arg0, %c8_i32 : i32
      %22 = vector.broadcast %21 : i32 to vector<8x128xi32>
      %23 = arith.addi %22, %20 : vector<8x128xi32>
      %c16_i32 = arith.constant 16 : i32
      %24 = vector.broadcast %c16_i32 : i32 to vector<8x128xi32>
      %25 = arith.cmpi slt, %23, %24 : vector<8x128xi32>
      %cst_9 = arith.constant 0.000000e+00 : f32
      %26 = vector.broadcast %cst_9 : f32 to vector<8x128xf32>
      %27 = arith.select %25, %13, %26 : vector<8x128xi1>, vector<8x128xf32>
      %28 = vector.shape_cast %27 : vector<8x128xf32> to vector<1x8x128xf32>
      %cst_10 = arith.constant dense<0.000000e+00> : vector<8x128xf32>
      %29 = vector.multi_reduction <add>, %28, %cst_10 [0] : vector<1x8x128xf32> to vector<8x128xf32>
      %c0_11 = arith.constant 0 : index
      %c0_12 = arith.constant 0 : index
      %30 = vector.load %arg3[%c0_11, %c0_12] : memref<8x128xf32, #tpu.memory_space<vmem>>, vector<8x128xf32>
      tpu.vector_store %arg3[%c0_11, %c0_12], %29 {strides = array<i32>} : memref<8x128xf32, #tpu.memory_space<vmem>>, vector<8x128xf32>,
    } else {
    }
    return
  }
  func.func @transform_0(%arg0: i32) -> (i32, i32) {
    %c0_i32 = arith.constant 0 : i32
    %c0_i32_0 = arith.constant 0 : i32
    return %arg0, %c0_i32 : i32, i32
  }
  func.func @transform_1(%arg0: i32) -> (i32, i32) {
    %c0_i32 = arith.constant 0 : i32
    %c0_i32_0 = arith.constant 0 : i32
    return %arg0, %c0_i32 : i32, i32
  }
  func.func @transform_2(%arg0: i32) -> (i32, i32) {
    %c0_i32 = arith.constant 0 : i32
    %c0_i32_0 = arith.constant 0 : i32
    return %arg0, %c0_i32 : i32, i32
  }
}

</mosaic_0001>

<llo_original>
// kernel: tpu_custom_call.1
$region0: #{tpu_custom_call.1}
  #allocation0 [shape = 'u32[]', space=smem, size = 0x4, offset = 0x4, fixed_abs, tag = 'smem constant byte address 0x4 - core index']
  #allocation1 [shape = 'u32[144,128]{1,0:T(1,128)}', space=vmem, size = 0x12000, scoped, tag = 'internal scratch']
  %s0 = inlined_call_operand.hbm [shape: f32[16,128], index: 0, kind: input, shape index: {}]
  %s1 = inlined_call_operand.hbm [shape: f32[16,128], index: 1, kind: input, shape index: {}]
  %s2 = inlined_call_operand.hbm [shape: f32[16,128], index: 2, kind: output, shape index: {}]
  %s3 = sld [smem:[#allocation0]]
  $region57: #{tpu_custom_call.1} parent=0
    _
  %s5 = ssub.s32 1, %s3
  %s6 = scalar_select 0, %s5, %s3
  $region1: #{tpu_custom_call.1} parent=0
    #allocation2 [shape = 'u8[8192]{0}', space=vmem, size = 0x2000, scoped, tag = 'input window, operand 0']
    #allocation3 [shape = 's32[2]{0}', space=sflag, size = 0x8, scoped, tag = 'scoped memory for tpu_custom_call.1']
    #allocation4 [shape = 's32[2]{0}', space=sflag, size = 0x8, scoped, tag = 'scoped memory for tpu_custom_call.1']
    #allocation5 [shape = 'u8[8192]{0}', space=vmem, size = 0x2000, scoped, tag = 'input window, operand 1']
    #allocation6 [shape = 's32[2]{0}', space=sflag, size = 0x8, scoped, tag = 'scoped memory for tpu_custom_call.1']
    #allocation7 [shape = 'u8[8192]{0}', space=vmem, size = 0x2000, scoped, tag = 'output window, operand 0']
    %7 = vsyncpa [#allocation3], 0
    %s8 = scalar_lea.sflag [#allocation3], 1
    %9 = vsyncpa %s8, 0
    %10 = vsyncpa [#allocation6], 0
    %s11 = scalar_lea.sflag [#allocation6], 1
    %12 = vsyncpa %s11, 0
    %13 = vsyncpa [#allocation4], 0
    %s14 = scalar_lea.sflag [#allocation4], 1
    %15 = vsyncpa %s14, 0
    loop: start=0, step=1, limit=4
    $region2: #{tpu_custom_call.1} parent=1 // loop_pre_header
      _
    $region3: #{tpu_custom_call.1} parent=1 // loop_header
      %s17 = sphi 0, %s21
      %p18 = scmp.ge.s32.totalorder %s17, 4
      %s27 = sphi 0, %s29
      %s30 = sphi 0, %s27
      %s31 = sphi 0, %s30
      %s47 = sphi 0, %s31
      %s53 = sphi 0, %s55
      %s56 = sphi 0, %s53
      %s57 = sphi 0, %s56
      %s73 = sphi 0, %s57
      %s79 = sphi 0, %s81
      %s82 = sphi 0, %s79
      %s83 = sphi 0, %s82
      %s99 = sphi 0, %s83
    $region4: #{tpu_custom_call.1} parent=1 // loop_header_branch
      %20 = sbr.rel (%p18) target = $region8
    $region5: #{tpu_custom_call.1} parent=1 // loop_body
      %s22 = ssub.s32 %s17, 1
      %s23 = ssub.s32 %s17, 2
      %s24 = sadd.s32 %s17, 1
      %s25 = ssub.s32 %s17, %s24
      %p26 = scmp.eq.s32.totalorder %s25, 0
      %s28 = sadd.s32 %s27, 1
      %s29 = scalar_select %p26, %s27, %s28
      %p32 = pneg %p26
      %p33 = scmp.eq.s32.totalorder %s17, 1
      %p34 = por %p32, %p33
      %p35 = scmp.ne.s32.totalorder %s27, %s30
      %p36 = scmp.eq.s32.totalorder %s17, 0
      %p37 = por %p35, %p36
      %p38 = scmp.ne.s32.totalorder %s27, %s30
      %p39 = scmp.eq.s32.totalorder %s22, 1
      %p40 = por %p38, %p39
      %p41 = scmp.ne.s32.totalorder %s30, %s31
      %p42 = scmp.eq.s32.totalorder %s22, 0
      %p43 = por %p41, %p42
      %p44 = scmp.ne.s32.totalorder %s30, %s31
      %p45 = scmp.eq.s32.totalorder %s23, 1
      %p46 = por %p44, %p45
      %p48 = scmp.ne.s32.totalorder %s31, %s47
      %p49 = scmp.eq.s32.totalorder %s23, 0
      %p50 = por %p48, %p49
      %s51 = ssub.s32 %s17, %s24
      %p52 = scmp.eq.s32.totalorder %s51, 0
      %s54 = sadd.s32 %s53, 1
      %s55 = scalar_select %p52, %s53, %s54
      %p58 = pneg %p52
      %p59 = scmp.eq.s32.totalorder %s17, 1
      %p60 = por %p58, %p59
      %p61 = scmp.ne.s32.totalorder %s53, %s56
      %p62 = scmp.eq.s32.totalorder %s17, 0
      %p63 = por %p61, %p62
      %p64 = scmp.ne.s32.totalorder %s53, %s56
      %p65 = scmp.eq.s32.totalorder %s22, 1
      %p66 = por %p64, %p65
      %p67 = scmp.ne.s32.totalorder %s56, %s57
      %p68 = scmp.eq.s32.totalorder %s22, 0
      %p69 = por %p67, %p68
      %p70 = scmp.ne.s32.totalorder %s56, %s57
      %p71 = scmp.eq.s32.totalorder %s23, 1
      %p72 = por %p70, %p71
      %p74 = scmp.ne.s32.totalorder %s57, %s73
      %p75 = scmp.eq.s32.totalorder %s23, 0
      %p76 = por %p74, %p75
      %s77 = ssub.s32 %s17, %s24
      %p78 = scmp.eq.s32.totalorder %s77, 0
      %s80 = sadd.s32 %s79, 1
      %s81 = scalar_select %p78, %s79, %s80
      %p84 = pneg %p78
      %p85 = scmp.eq.s32.totalorder %s17, 1
      %p86 = por %p84, %p85
      %p87 = scmp.ne.s32.totalorder %s79, %s82
      %p88 = scmp.eq.s32.totalorder %s17, 0
      %p89 = por %p87, %p88
      %p90 = scmp.ne.s32.totalorder %s79, %s82
      %p91 = scmp.eq.s32.totalorder %s22, 1
      %p92 = por %p90, %p91
      %p93 = scmp.ne.s32.totalorder %s82, %s83
      %p94 = scmp.eq.s32.totalorder %s22, 0
      %p95 = por %p93, %p94
      %p96 = scmp.ne.s32.totalorder %s82, %s83
      %p97 = scmp.eq.s32.totalorder %s23, 1
      %p98 = por %p96, %p97
      %p100 = scmp.ne.s32.totalorder %s83, %s99
      %p101 = scmp.eq.s32.totalorder %s23, 0
      %p102 = por %p100, %p101
      %p103 = scmp.le.s32.totalorder 1, %s17
      %p104 = scmp.lt.s32.totalorder %s17, 3
      %p105 = pnand %p103, %p104
      %p106 = pneg %p105
      // Predicated region
      $region9: #{tpu_custom_call.1} parent=5 // pred_check
        _
      $region10: #{tpu_custom_call.1} parent=5 // pred_check_branch
        %108 = sbr.rel (%p105) target = $region12
      $region11: #{tpu_custom_call.1} parent=5 // pred_region
        %s109 = ssub.s32 %s17, 1
      $region12: #{tpu_custom_call.1} parent=5 // pred_fallthru
        _
      %p110 = scmp.lt.s32.totalorder %s17, 2
      // Predicated region
      $region13: #{tpu_custom_call.1} parent=5 // pred_check
        %p111 = pneg %p110
      $region14: #{tpu_custom_call.1} parent=5 // pred_check_branch
        %113 = sbr.rel (%p111) target = $region16
      $region15: #{tpu_custom_call.1} parent=5 // pred_region
        // Predicated region
        $region17: #{tpu_custom_call.1} parent=15 // pred_check
          %p114 = pneg %p37
        $region18: #{tpu_custom_call.1} parent=15 // pred_check_branch
          %116 = sbr.rel (%p114) target = $region20
        $region19: #{tpu_custom_call.1} parent=15 // pred_region
          %s117 = sand.u32 %s27, 1
          %s118 = scalar_lea.sflag [#allocation3], %s117
          %s119 = sand.u32 %s27, 1
          %s120 = smul.addr %s119, 8
          %s121 = scalar_lea.vmem [#allocation2], %s120
          %s123 = ssub.s32 128, 128
          %124 = vsyncadd %s118, %s123
          %s125 = smul.addr %s17, 128
          %s126 = scalar_lea.hbm %s0, %s125
          %s128 = sshll.u32 %s121, 4
          %s129 = int_to_ptr.vmem [resolvable:$true] %s128
          %131 = dma.hbm_to_vmem [thread:$0]  %s126, 128, %s129, %s118
        $region20: #{tpu_custom_call.1} parent=15 // pred_fallthru
          _
        // Predicated region
        $region21: #{tpu_custom_call.1} parent=15 // pred_check
          %p132 = pneg %p63
        $region22: #{tpu_custom_call.1} parent=15 // pred_check_branch
          %134 = sbr.rel (%p132) target = $region24
        $region23: #{tpu_custom_call.1} parent=15 // pred_region
          %s135 = sand.u32 %s53, 1
          %s136 = scalar_lea.sflag [#allocation6], %s135
          %s137 = sand.u32 %s53, 1
          %s138 = smul.addr %s137, 8
          %s139 = scalar_lea.vmem [#allocation5], %s138
          %s141 = ssub.s32 128, 128
          %142 = vsyncadd %s136, %s141
          %s143 = smul.addr %s17, 128
          %s144 = scalar_lea.hbm %s1, %s143
          %s146 = sshll.u32 %s139, 4
          %s147 = int_to_ptr.vmem [resolvable:$true] %s146
          %149 = dma.hbm_to_vmem [thread:$0]  %s144, 128, %s147, %s136
        $region24: #{tpu_custom_call.1} parent=15 // pred_fallthru
          _
      $region16: #{tpu_custom_call.1} parent=5 // pred_fallthru
        _
      %p150 = scmp.le.s32.totalorder 1, %s17
      %p151 = scmp.lt.s32.totalorder %s17, 3
      %p152 = pnand %p150, %p151
      %p153 = pneg %p152
      // Predicated region
      $region25: #{tpu_custom_call.1} parent=5 // pred_check
        _
      $region26: #{tpu_custom_call.1} parent=5 // pred_check_branch
        %155 = sbr.rel (%p152) target = $region28
      $region27: #{tpu_custom_call.1} parent=5 // pred_region
        %s156 = ssub.s32 %s17, 1
        %s157 = sand.u32 %s30, 1
        %s158 = scalar_lea.sflag [#allocation3], %s157
        %s159 = sand.u32 %s30, 1
        %s160 = smul.addr %s159, 8
        %s161 = scalar_lea.vmem [#allocation2], %s160
        // Predicated region
        $region29: #{tpu_custom_call.1} parent=27 // pred_check
          %p162 = pneg %p43
        $region30: #{tpu_custom_call.1} parent=27 // pred_check_branch
          %164 = sbr.rel (%p162) target = $region32
        $region31: #{tpu_custom_call.1} parent=27 // pred_region
          %165 = dma.done %s158, 128
        $region32: #{tpu_custom_call.1} parent=27 // pred_fallthru
          _
        %s166 = sand.u32 %s56, 1
        %s167 = scalar_lea.sflag [#allocation6], %s166
        %s168 = sand.u32 %s56, 1
        %s169 = smul.addr %s168, 8
        %s170 = scalar_lea.vmem [#allocation5], %s169
        // Predicated region
        $region33: #{tpu_custom_call.1} parent=27 // pred_check
          %p171 = pneg %p69
        $region34: #{tpu_custom_call.1} parent=27 // pred_check_branch
          %173 = sbr.rel (%p171) target = $region36
        $region35: #{tpu_custom_call.1} parent=27 // pred_region
          %174 = dma.done %s167, 128
        $region36: #{tpu_custom_call.1} parent=27 // pred_fallthru
          _
        %s175 = sand.u32 %s30, 1
        %s176 = scalar_lea.sflag [#allocation3], %s175
        %s177 = sand.u32 %s30, 1
        %s178 = smul.addr %s177, 8
        %s179 = scalar_lea.vmem [#allocation2], %s178
        %p180 = pneg %p43
        %p181 = pneg %p40
        %s182 = sand.u32 %s56, 1
        %s183 = scalar_lea.sflag [#allocation6], %s182
        %s184 = sand.u32 %s56, 1
        %s185 = smul.addr %s184, 8
        %s186 = scalar_lea.vmem [#allocation5], %s185
        %p187 = pneg %p69
        %p188 = pneg %p66
        %p189 = pneg %p95
        %p190 = pneg %p92
        %s191 = sand.u32 %s82, 1
        %s192 = scalar_lea.sflag [#allocation4], %s191
        %s193 = sand.u32 %s82, 1
        %s194 = smul.addr %s193, 8
        %s195 = scalar_lea.vmem [#allocation7], %s194
        %v196 = vld [vmem:[%s161] sm:$0xff]
        %v197 = vld [vmem:[%s170] sm:$0xff]
        %v198 = vmax.f32 %v196, 1e-06
        %v199 = vmin.f32 %v198, 0.999999
        %v200 = vmax.f32 %v197, 1e-06
        %v201 = vmin.f32 %v200, 0.999999
        %v202 = vsub.f32 1.0, %v201
        %v203 = vmul.f32 %v199, %v202
        %v204 = vlog2.pop %v203
        %v205 = vmul.f32 %v204, 0.6931472
        %p206 = scmp.lt.s32.totalorder %s22, 1
        // Predicated region
        $region37: #{tpu_custom_call.1} parent=27 // pred_check
          %p207 = pneg %p206
        $region38: #{tpu_custom_call.1} parent=27 // pred_check_branch
          %209 = sbr.rel (%p207) target = $region40
        $region39: #{tpu_custom_call.1} parent=27 // pred_region
          %v210 = vadd.f32 %v205, 0.0
          %211 = vst [vmem:[%s195] sm:$0xff] %v210
        $region40: #{tpu_custom_call.1} parent=27 // pred_fallthru
          _
        %p212 = scmp.eq.s32.totalorder %s22, 1
        // Predicated region
        $region41: #{tpu_custom_call.1} parent=27 // pred_check
          %p213 = pneg %p212
        $region42: #{tpu_custom_call.1} parent=27 // pred_check_branch
          %215 = sbr.rel (%p213) target = $region44
        $region43: #{tpu_custom_call.1} parent=27 // pred_region
          %v216 = vlaneseq
          %v217 = vshrl.u32 %v216, 7
          %s218 = smul.u32 %s22, 8
          %v219 = vstv %s218
          %v220 = vadd.s32 %v219, %v217
          %vm221 = vcmp.lt.s32.totalorder %v220, 16
          %v222 = vsel %vm221, %v205, 0.0
          %v223 = vadd.f32 %v222, 0.0
          %224 = vst [vmem:[%s195] sm:$0xff] %v223
        $region44: #{tpu_custom_call.1} parent=27 // pred_fallthru
          _
        %s225 = sand.u32 %s82, 1
        %s226 = scalar_lea.sflag [#allocation4], %s225
        %s227 = sand.u32 %s82, 1
        %s228 = smul.addr %s227, 8
        %s229 = scalar_lea.vmem [#allocation7], %s228
        // Predicated region
        $region45: #{tpu_custom_call.1} parent=27 // pred_check
          %p230 = pneg %p92
        $region46: #{tpu_custom_call.1} parent=27 // pred_check_branch
          %232 = sbr.rel (%p230) target = $region48
        $region47: #{tpu_custom_call.1} parent=27 // pred_region
          %s234 = ssub.s32 128, 128
          %235 = vsyncadd %s226, %s234
          %s236 = smul.addr %s22, 128
          %s237 = scalar_lea.hbm %s2, %s236
          %s239 = sshll.u32 %s229, 4
          %s240 = int_to_ptr.vmem [resolvable:$true] %s239
          %242 = dma.vmem_to_hbm [thread:$0]  %s240, 128, %s237, %s226
        $region48: #{tpu_custom_call.1} parent=27 // pred_fallthru
          _
      $region28: #{tpu_custom_call.1} parent=5 // pred_fallthru
        _
      %p243 = scmp.le.s32.totalorder 2, %s17
      // Predicated region
      $region49: #{tpu_custom_call.1} parent=5 // pred_check
        %p244 = pneg %p243
      $region50: #{tpu_custom_call.1} parent=5 // pred_check_branch
        %246 = sbr.rel (%p244) target = $region52
      $region51: #{tpu_custom_call.1} parent=5 // pred_region
        %s247 = ssub.s32 %s17, 2
        // Predicated region
        $region53: #{tpu_custom_call.1} parent=51 // pred_check
          %p248 = pneg %p98
        $region54: #{tpu_custom_call.1} parent=51 // pred_check_branch
          %250 = sbr.rel (%p248) target = $region56
        $region55: #{tpu_custom_call.1} parent=51 // pred_region
          %s251 = sand.u32 %s83, 1
          %s252 = scalar_lea.sflag [#allocation4], %s251
          %s253 = sand.u32 %s83, 1
          %s254 = smul.addr %s253, 8
          %s255 = scalar_lea.vmem [#allocation7], %s254
          %256 = dma.done %s252, 128
        $region56: #{tpu_custom_call.1} parent=51 // pred_fallthru
          _
      $region52: #{tpu_custom_call.1} parent=5 // pred_fallthru
        _
    $region6: #{tpu_custom_call.1} parent=1 // loop_footer
      %s21 = sadd.s32 1, %s17
    $region7: #{tpu_custom_call.1} parent=1 // loop_footer_branch
      %16 = sbr.rel target = $region3
    $region8: #{tpu_custom_call.1} parent=1 // loop_exit
      _
    %257 = vsyncpa [#allocation3], 1
    %s258 = scalar_lea.sflag [#allocation3], 1
    %259 = vsyncpa %s258, 1
    %260 = vsyncpa [#allocation6], 1
    %s261 = scalar_lea.sflag [#allocation6], 1
    %262 = vsyncpa %s261, 1
    %263 = vsyncpa [#allocation4], 1
    %s264 = scalar_lea.sflag [#allocation4], 1
    %265 = vsyncpa %s264, 1

</llo_original>
